<compile_context>
chip_gen: v7x
topology: tpu7x:2x2x1
jax: 0.10.0
libtpu: 0.0.40
codegen_flags: <defaults>
</compile_context>

<pallas_src>
import functools

import jax
import jax.numpy as jnp
from jax.experimental import pallas as pl
from jax.experimental.pallas import tpu as pltpu

H = 768        # hidden size (fixed by the classifier: nn.Linear(768, 3))
C = 3          # number of classes
NPAD = 128     # classifier out-dim padded to one full lane width

_H_VMEM_BUDGET = 40 * 1024 * 1024   # double-buffered h stream budget (v7x-safe)


def _round_up(x, m):
    return ((x + m - 1) // m) * m


def _multitask_kernel(h_ref, w_ref, b_ref, o_ref, *, inv_s):
    # h_ref : (TB, TS, H)  bf16/f32  current (batch-tile, seq-tile) of last_hidden
    # w_ref : (H, NPAD)    f32       padded classifier weight
    # b_ref : (1, NPAD)    f32       padded classifier bias
    # o_ref : (TB, NPAD)   f32       resident output block, doubles as accumulator
    si = pl.program_id(1)

    @pl.when(si == 0)
    def _():
        o_ref[...] = jnp.zeros_like(o_ref)

    # Partial sequence sum in f32 (input may be bf16), folded straight into the
    # classifier matmul so the only persistent state is the (TB, 128) output tile.
    pooled_part = jnp.sum(h_ref[...].astype(jnp.float32), axis=1)        # (TB, H)
    o_ref[...] += jnp.dot(pooled_part, w_ref[...],
                          preferred_element_type=jnp.float32)

    @pl.when(si == pl.num_programs(1) - 1)
    def _():
        # mean = (1/S) * sum, folded in here as a static scalar; dropout is
        # eval-mode identity.
        # TODO(synk): training-mode dropout would need pltpu.prng_seed/prng_random_bits.
        o_ref[...] = jax.nn.sigmoid(o_ref[...] * inv_s + b_ref[...])


def init_classifier_params(W, b):
    """One-time parameter prep: pad the out-dim 3 -> 128 lanes (f32 kept — the
    classifier matmul is tiny and fully hidden under the activation DMA)."""
    Wp = jnp.zeros((H, NPAD), jnp.float32).at[:, :C].set(W.astype(jnp.float32))
    bp = jnp.zeros((1, NPAD), jnp.float32).at[0, :C].set(b.astype(jnp.float32))
    return Wp, bp


@functools.partial(jax.jit, static_argnames=("tb", "ts"))
def multitask_forward(last_hidden, Wp, bp, *, tb=128, ts=None):
    """last_hidden: (B, S, H) bf16 (preferred) or f32; Wp: (H, 128) f32 padded;
    bp: (1, 128) f32 padded.  Returns sigmoid logits (B, C).

    tb: batch tile (multiple of 8; auto-clamped so small batches still get >= 2
        parallel blocks for v7x's two TensorCores and so the double-buffered
        activation stream fits every generation's VMEM).
    ts: sequence tile (defaults to 128 when S is a multiple of 128, else full S)."""
    B, S, _ = last_hidden.shape

    # --- sequence tile -------------------------------------------------------
    if ts is None:
        ts = 128 if S % 128 == 0 else S
    assert S % ts == 0, "sequence length must be divisible by the sequence tile"
    assert ts == S or ts % 8 == 0, "ts must be a multiple of 8 (or the full S)"

    # --- batch tile ----------------------------------------------------------
    # Keep >= 2 batch blocks when the batch allows it (v7x shards the 'parallel'
    # axis across its 2 TensorCores); tb stays a multiple of 8 for sublane-full
    # (tb, 128) output tiles.
    tb = min(tb, max(8, _round_up(-(-B // 2), 8)))
    tb = max(8, _round_up(tb, 8))
    itemsize = jnp.dtype(last_hidden.dtype).itemsize
    # Shrink tb until the double-buffered h stream fits a v7x-safe VMEM budget.
    while tb > 8 and 2 * tb * ts * H * itemsize > _H_VMEM_BUDGET:
        tb = max(8, _round_up(tb // 2, 8))

    # --- VMEM limit (v5e default scoped VMEM is only 16 MiB) ------------------
    vmem_bytes = (2 * tb * ts * H * itemsize      # double-buffered h blocks
                  + 2 * H * NPAD * 4              # Wp
                  + 2 * tb * NPAD * 4             # output block
                  + 2 * NPAD * 4                  # bias
                  + (2 << 20))                    # headroom
    vmem_limit = int(min(max(vmem_bytes, 32 << 20), 96 << 20))

    kernel = functools.partial(_multitask_kernel, inv_s=1.0 / float(S))

    out = pl.pallas_call(
        kernel,
        out_shape=jax.ShapeDtypeStruct((B, NPAD), jnp.float32),
        grid_spec=pltpu.PrefetchScalarGridSpec(
            num_scalar_prefetch=0,
            # cdiv batch grid: no jnp.pad copy of the activation tensor; Pallas
            # masks the partial edge block (garbage rows never reach real output).
            grid=(pl.cdiv(B, tb), S // ts),
            in_specs=[
                pl.BlockSpec((tb, ts, H), lambda bi, si: (bi, si, 0)),
                pl.BlockSpec((H, NPAD), lambda bi, si: (0, 0)),
                pl.BlockSpec((1, NPAD), lambda bi, si: (0, 0)),
            ],
            out_specs=pl.BlockSpec((tb, NPAD), lambda bi, si: (bi, 0)),
        ),
        compiler_params=pltpu.CompilerParams(
            dimension_semantics=("parallel", "arbitrary"),
            vmem_limit_bytes=vmem_limit),
    )(last_hidden, Wp, bp)

    # Padded class lanes are sliced off.
    return out[:, :C]


def embedding_model_stub(embed_table, input_ids, attention_mask):
    # Stand-in for the external transformer `embedding_model`: token lookup,
    # emitted in bf16 like a real transformer's last_hidden_state.
    # attention_mask is accepted (as in the PyTorch signature) but unused; the
    # reference pooling is an unmasked `.mean(dim=1)`.
    # TODO(synk): fuse the pooling + classifier kernel into the transformer's
    # final-layer epilogue so last_hidden never round-trips HBM.
    del attention_mask
    return embed_table[input_ids].astype(jnp.bfloat16)        # (B, S, H) bf16


if __name__ == "__main__":
    B, S, VOCAB = 2, 8, 100
    key = jax.random.PRNGKey(0)
    k_tab, k_w, k_b, k_ids = jax.random.split(key, 4)

    # Deterministic synthetic parameters
    embed_table = jax.random.normal(k_tab, (VOCAB, H), dtype=jnp.float32) * 0.02
    W = jax.random.normal(k_w, (H, C), dtype=jnp.float32) * 0.02   # Linear(768, 3)
    b = jax.random.normal(k_b, (C,), dtype=jnp.float32) * 0.02

    # Inputs: (batch_size, max_length)
    input_ids = jax.random.randint(k_ids, (B, S), 0, VOCAB, dtype=jnp.int32)
    attention_mask = jnp.ones((B, S), dtype=jnp.int32)

    # One-time init: padded f32 classifier weight + bias.
    Wp, bp = init_classifier_params(W, b)

    # bf16 activation stream (halves the HBM bytes the kernel must read).
    last_hidden = embedding_model_stub(embed_table, input_ids, attention_mask)

    logits = multitask_forward(last_hidden, Wp, bp)
    logits = jax.block_until_ready(logits)

    # Pure-JAX f32 reference on the same bf16 hidden states.
    ref = jax.nn.sigmoid(jnp.mean(last_hidden.astype(jnp.float32), axis=1) @ W + b)
    assert logits.shape == (B, C)
    assert jnp.allclose(logits, ref, atol=2e-3), "mismatch vs reference"

    print("KERNEL_OK")
</pallas_src>

<mosaic_0001>
module attributes {stable_mosaic.version = 11 : i64} {
  func.func @_multitask_kernel(%arg0: i32, %arg1: i32, %arg2: memref<8x8x768xbf16, #tpu.memory_space<vmem>>, %arg3: memref<768x128xf32, #tpu.memory_space<vmem>>, %arg4: memref<1x128xf32, #tpu.memory_space<vmem>>, %arg5: memref<8x128xf32, #tpu.memory_space<vmem>>) attributes {dimension_semantics = [#tpu.dimension_semantics<parallel>, #tpu.dimension_semantics<arbitrary>], iteration_bounds = array<i64: 1, 1>, scalar_prefetch = 0 : i64, scratch_operands = 0 : i64, tpu.core_type = #tpu.core_type<tc>, window_params = [{transform_indices = @transform_0, window_bounds = array<i64: 8, 8, 768>}, {pipeline_mode = #tpu.pipeline_mode<synchronous>, transform_indices = @transform_1, window_bounds = array<i64: 768, 128>}, {pipeline_mode = #tpu.pipeline_mode<synchronous>, transform_indices = @transform_2, window_bounds = array<i64: 1, 128>}, {transform_indices = @transform_3, window_bounds = array<i64: 8, 128>}]} {
    %c0_i32 = arith.constant 0 : i32
    %0 = arith.cmpi eq, %arg1, %c0_i32 : i32
    %1 = arith.extui %0 : i1 to i32
    %c0_i32_0 = arith.constant 0 : i32
    %2 = arith.cmpi ne, %1, %c0_i32_0 : i32
    scf.if %2 {
      %cst_12 = arith.constant 0.000000e+00 : f32
      %14 = vector.broadcast %cst_12 : f32 to vector<8x128xf32>
      %c0_13 = arith.constant 0 : index
      %c0_14 = arith.constant 0 : index
      %15 = vector.load %arg5[%c0_13, %c0_14] : memref<8x128xf32, #tpu.memory_space<vmem>>, vector<8x128xf32>
      tpu.vector_store %arg5[%c0_13, %c0_14], %14 {strides = array<i32>} : memref<8x128xf32, #tpu.memory_space<vmem>>, vector<8x128xf32>,
    } else {
    }
    %c0 = arith.constant 0 : index
    %c0_1 = arith.constant 0 : index
    %c0_2 = arith.constant 0 : index
    %3 = vector.load %arg2[%c0, %c0_1, %c0_2] : memref<8x8x768xbf16, #tpu.memory_space<vmem>>, vector<8x8x768xbf16>
    %4 = arith.extf %3 : vector<8x8x768xbf16> to vector<8x8x768xf32>
    %cst = arith.constant dense<0.000000e+00> : vector<8x768xf32>
    %5 = vector.multi_reduction <add>, %4, %cst [1] : vector<8x8x768xf32> to vector<8x768xf32>
    %c0_3 = arith.constant 0 : index
    %c0_4 = arith.constant 0 : index
    %6 = vector.load %arg5[%c0_3, %c0_4] : memref<8x128xf32, #tpu.memory_space<vmem>>, vector<8x128xf32>
    %c0_5 = arith.constant 0 : index
    %c0_6 = arith.constant 0 : index
    %7 = vector.load %arg3[%c0_5, %c0_6] : memref<768x128xf32, #tpu.memory_space<vmem>>, vector<768x128xf32>
    %cst_7 = arith.constant dense<0.000000e+00> : vector<8x128xf32>
    %8 = tpu.matmul %5, %7, %cst_7 {dimension_numbers = #tpu.dot_dimension_numbers<[1], [0], [0], [1], [0, 0, 1, 1], [], []>} : vector<8x768xf32>, vector<768x128xf32>, vector<8x128xf32> -> vector<8x128xf32>
    %9 = arith.addf %6, %8 : vector<8x128xf32>
    %c0_8 = arith.constant 0 : index
    %c0_9 = arith.constant 0 : index
    %10 = vector.load %arg5[%c0_8, %c0_9] : memref<8x128xf32, #tpu.memory_space<vmem>>, vector<8x128xf32>
    tpu.vector_store %arg5[%c0_8, %c0_9], %9 {strides = array<i32>} : memref<8x128xf32, #tpu.memory_space<vmem>>, vector<8x128xf32>,
    %c0_i32_10 = arith.constant 0 : i32
    %11 = arith.cmpi eq, %arg1, %c0_i32_10 : i32
    %12 = arith.extui %11 : i1 to i32
    %c0_i32_11 = arith.constant 0 : i32
    %13 = arith.cmpi ne, %12, %c0_i32_11 : i32
    scf.if %13 {
      %c0_12 = arith.constant 0 : index
      %c0_13 = arith.constant 0 : index
      %14 = vector.load %arg5[%c0_12, %c0_13] : memref<8x128xf32, #tpu.memory_space<vmem>>, vector<8x128xf32>
      %cst_14 = arith.constant 1.250000e-01 : f32
      %15 = vector.broadcast %cst_14 : f32 to vector<8x128xf32>
      %16 = arith.mulf %14, %15 : vector<8x128xf32>
      %c0_15 = arith.constant 0 : index
      %c0_16 = arith.constant 0 : index
      %17 = vector.load %arg4[%c0_15, %c0_16] : memref<1x128xf32, #tpu.memory_space<vmem>>, vector<1x128xf32>
      %18 = vector.broadcast %17 : vector<1x128xf32> to vector<8x128xf32>
      %19 = arith.addf %16, %18 : vector<8x128xf32>
      %20 = arith.negf %19 : vector<8x128xf32>
      %21 = math.exp %20 : vector<8x128xf32>
      %cst_17 = arith.constant 1.000000e+00 : f32
      %22 = vector.broadcast %cst_17 : f32 to vector<8x128xf32>
      %23 = arith.addf %22, %21 : vector<8x128xf32>
      %24 = arith.divf %22, %23 : vector<8x128xf32>
      %c0_18 = arith.constant 0 : index
      %c0_19 = arith.constant 0 : index
      %25 = vector.load %arg5[%c0_18, %c0_19] : memref<8x128xf32, #tpu.memory_space<vmem>>, vector<8x128xf32>
      tpu.vector_store %arg5[%c0_18, %c0_19], %24 {strides = array<i32>} : memref<8x128xf32, #tpu.memory_space<vmem>>, vector<8x128xf32>,
    } else {
    }
    return
  }
  func.func @transform_0(%arg0: i32, %arg1: i32) -> (i32, i32, i32) {
    %c0_i32 = arith.constant 0 : i32
    %c0_i32_0 = arith.constant 0 : i32
    return %arg0, %arg1, %c0_i32 : i32, i32, i32
  }
  func.func @transform_1(%arg0: i32, %arg1: i32) -> (i32, i32) {
    %c0_i32 = arith.constant 0 : i32
    %c0_i32_0 = arith.constant 0 : i32
    %c0_i32_1 = arith.constant 0 : i32
    return %c0_i32, %c0_i32_0 : i32, i32
  }
  func.func @transform_2(%arg0: i32, %arg1: i32) -> (i32, i32) {
    %c0_i32 = arith.constant 0 : i32
    %c0_i32_0 = arith.constant 0 : i32
    %c0_i32_1 = arith.constant 0 : i32
    return %c0_i32, %c0_i32_0 : i32, i32
  }
  func.func @transform_3(%arg0: i32, %arg1: i32) -> (i32, i32) {
    %c0_i32 = arith.constant 0 : i32
    %c0_i32_0 = arith.constant 0 : i32
    return %arg0, %c0_i32 : i32, i32
  }
}

</mosaic_0001>

<llo_original>
// kernel: multitask_forward.1
$region0: #{multitask_forward.1}
  #allocation0 [shape = 'u32[]', space=smem, size = 0x4, offset = 0x4, fixed_abs, tag = 'smem constant byte address 0x4 - core index']
  #allocation1 [shape = 'u32[144,128]{1,0:T(1,128)}', space=vmem, size = 0x12000, scoped, tag = 'internal scratch']
  %s0 = inlined_call_operand.hbm [shape: bf16[2,8,768], index: 0, kind: input, shape index: {}]
  %s1 = inlined_call_operand.hbm [shape: f32[768,128], index: 1, kind: input, shape index: {}]
  %s2 = inlined_call_operand.vmem [shape: f32[1,128], index: 2, kind: input, shape index: {}]
  %s3 = inlined_call_operand.hbm [shape: f32[2,128], index: 3, kind: output, shape index: {}]
  %s4 = sld [smem:[#allocation0]]
  $region38: #{multitask_forward.1} parent=0
    _
  %s6 = ssub.s32 1, %s4
  %s7 = scalar_select 0, %s6, %s4
  $region1: #{multitask_forward.1} parent=0
    #allocation2 [shape = 'u8[98304]{0}', space=vmem, size = 0x18000, scoped, tag = 'input window, operand 0, single buffered']
    #allocation3 [shape = 's32[1]{0}', space=sflag, size = 0x4, scoped, tag = 'scoped memory for multitask_forward.1']
    #allocation4 [shape = 's32[1]{0}', space=sflag, size = 0x4, scoped, tag = 'scoped memory for multitask_forward.1']
    #allocation5 [shape = 'u8[393216]{0}', space=vmem, size = 0x60000, scoped, tag = 'input window, operand 1, single buffered']
    #allocation6 [shape = 's32[1]{0}', space=sflag, size = 0x4, scoped, tag = 'scoped memory for multitask_forward.1']
    #allocation7 [shape = 'u8[4096]{0}', space=vmem, size = 0x1000, scoped, tag = 'output window, operand 0, single buffered']
    %8 = vsyncpa [#allocation3], 0
    %9 = vsyncpa [#allocation6], 0
    %10 = vsyncpa [#allocation4], 0
    // Predicated region
    $region2: #{multitask_forward.1} parent=1 // pred_check
      _
    $region3: #{multitask_forward.1} parent=1 // pred_check_branch
      %12 = sbr.rel (0) target = $region5
    $region4: #{multitask_forward.1} parent=1 // pred_region
      %s14 = ssub.s32 3072, 768
      %15 = vsyncadd [#allocation3], %s14
      %s16 = sshll.u32 [#allocation2], 4
      %s17 = int_to_ptr.vmem [resolvable:$true] %s16
      %22 = dma.hbm_to_vmem [thread:$0]  %s0, 768, %s17, [#allocation3], 384, 384, 24
    $region5: #{multitask_forward.1} parent=1 // pred_fallthru
      _
    // Predicated region
    $region6: #{multitask_forward.1} parent=1 // pred_check
      _
    $region7: #{multitask_forward.1} parent=1 // pred_check_branch
      %24 = sbr.rel (0) target = $region9
    $region8: #{multitask_forward.1} parent=1 // pred_region
      %s26 = ssub.s32 12288, 12288
      %27 = vsyncadd [#allocation6], %s26
      %s28 = sshll.u32 [#allocation5], 4
      %s29 = int_to_ptr.vmem [resolvable:$true] %s28
      %34 = dma.hbm_to_vmem [thread:$0]  %s1, 12288, %s29, [#allocation6], 128, 128, 8
    $region9: #{multitask_forward.1} parent=1 // pred_fallthru
      _
    // Predicated region
    $region10: #{multitask_forward.1} parent=1 // pred_check
      _
    $region11: #{multitask_forward.1} parent=1 // pred_check_branch
      %36 = sbr.rel (0) target = $region13
    $region12: #{multitask_forward.1} parent=1 // pred_region
      _
    $region13: #{multitask_forward.1} parent=1 // pred_fallthru
      _
    // Predicated region
    $region14: #{multitask_forward.1} parent=1 // pred_check
      _
    $region15: #{multitask_forward.1} parent=1 // pred_check_branch
      %38 = sbr.rel (0) target = $region17
    $region16: #{multitask_forward.1} parent=1 // pred_region
      %39 = dma.done [#allocation3], 3072
    $region17: #{multitask_forward.1} parent=1 // pred_fallthru
      _
    // Predicated region
    $region18: #{multitask_forward.1} parent=1 // pred_check
      _
    $region19: #{multitask_forward.1} parent=1 // pred_check_branch
      %41 = sbr.rel (0) target = $region21
    $region20: #{multitask_forward.1} parent=1 // pred_region
      %42 = dma.done [#allocation6], 12288
    $region21: #{multitask_forward.1} parent=1 // pred_fallthru
      _
    %p43 = scmp.eq.s32.totalorder 0, 0
    // Predicated region
    $region22: #{multitask_forward.1} parent=1 // pred_check
      %p44 = pneg %p43
    $region23: #{multitask_forward.1} parent=1 // pred_check_branch
      %46 = sbr.rel (%p44) target = $region25
    $region24: #{multitask_forward.1} parent=1 // pred_region
      %47 = vst [vmem:[#allocation7] sm:$0xff] 0.0
    $region25: #{multitask_forward.1} parent=1 // pred_fallthru
      _
    %v48 = vld [vmem:[#allocation2] sm:$0xff]
    %v49 = vld [vmem:[#allocation2 + $0x8] sm:$0xff]
    %v50 = vld [vmem:[#allocation2 + $0x10] sm:$0xff]
    %v51 = vld [vmem:[#allocation2 + $0x18] sm:$0xff]
    %v52 = vld [vmem:[#allocation2 + $0x20] sm:$0xff]
    %v53 = vld [vmem:[#allocation2 + $0x28] sm:$0xff]
    %v54 = vld [vmem:[#allocation2 + $0x30] sm:$0xff]
    %v55 = vld [vmem:[#allocation2 + $0x38] sm:$0xff]
    %v56 = vld [vmem:[#allocation2 + $0x40] sm:$0xff]
    %v57 = vld [vmem:[#allocation2 + $0x48] sm:$0xff]
    %v58 = vld [vmem:[#allocation2 + $0x50] sm:$0xff]
    %v59 = vld [vmem:[#allocation2 + $0x58] sm:$0xff]
    %v60 = vld [vmem:[#allocation2 + $0x60] sm:$0xff]
    %v61 = vld [vmem:[#allocation2 + $0x68] sm:$0xff]
    %v62 = vld [vmem:[#allocation2 + $0x70] sm:$0xff]
    %v63 = vld [vmem:[#allocation2 + $0x78] sm:$0xff]
    %v64 = vld [vmem:[#allocation2 + $0x80] sm:$0xff]
    %v65 = vld [vmem:[#allocation2 + $0x88] sm:$0xff]
    %v66 = vld [vmem:[#allocation2 + $0x90] sm:$0xff]
    %v67 = vld [vmem:[#allocation2 + $0x98] sm:$0xff]
    %v68 = vld [vmem:[#allocation2 + $0xa0] sm:$0xff]
    %v69 = vld [vmem:[#allocation2 + $0xa8] sm:$0xff]
    %v70 = vld [vmem:[#allocation2 + $0xb0] sm:$0xff]
    %v71 = vld [vmem:[#allocation2 + $0xb8] sm:$0xff]
    %v72 = vunpack.c.l.bf16 %v48
    %v73 = vunpack.c.h.bf16 %v48
    %v74 = vunpack.c.l.bf16 %v49
    %v75 = vunpack.c.h.bf16 %v49
    %v76 = vunpack.c.l.bf16 %v50
    %v77 = vunpack.c.h.bf16 %v50
    %v78 = vunpack.c.l.bf16 %v51
    %v79 = vunpack.c.h.bf16 %v51
    %v80 = vunpack.c.l.bf16 %v52
    %v81 = vunpack.c.h.bf16 %v52
    %v82 = vunpack.c.l.bf16 %v53
    %v83 = vunpack.c.h.bf16 %v53
    %v84 = vunpack.c.l.bf16 %v54
    %v85 = vunpack.c.h.bf16 %v54
    %v86 = vunpack.c.l.bf16 %v55
    %v87 = vunpack.c.h.bf16 %v55
    %v88 = vunpack.c.l.bf16 %v56
    %v89 = vunpack.c.h.bf16 %v56
    %v90 = vunpack.c.l.bf16 %v57
    %v91 = vunpack.c.h.bf16 %v57
    %v92 = vunpack.c.l.bf16 %v58
    %v93 = vunpack.c.h.bf16 %v58
    %v94 = vunpack.c.l.bf16 %v59
    %v95 = vunpack.c.h.bf16 %v59
    %v96 = vunpack.c.l.bf16 %v60
    %v97 = vunpack.c.h.bf16 %v60
    %v98 = vunpack.c.l.bf16 %v61
    %v99 = vunpack.c.h.bf16 %v61
    %v100 = vunpack.c.l.bf16 %v62
    %v101 = vunpack.c.h.bf16 %v62
    %v102 = vunpack.c.l.bf16 %v63
    %v103 = vunpack.c.h.bf16 %v63
    %v104 = vunpack.c.l.bf16 %v64
    %v105 = vunpack.c.h.bf16 %v64
    %v106 = vunpack.c.l.bf16 %v65
    %v107 = vunpack.c.h.bf16 %v65
    %v108 = vunpack.c.l.bf16 %v66
    %v109 = vunpack.c.h.bf16 %v66
    %v110 = vunpack.c.l.bf16 %v67
    %v111 = vunpack.c.h.bf16 %v67
    %v112 = vunpack.c.l.bf16 %v68
    %v113 = vunpack.c.h.bf16 %v68
    %v114 = vunpack.c.l.bf16 %v69
    %v115 = vunpack.c.h.bf16 %v69
    %v116 = vunpack.c.l.bf16 %v70
    %v117 = vunpack.c.h.bf16 %v70
    %v118 = vunpack.c.l.bf16 %v71
    %v119 = vunpack.c.h.bf16 %v71
    %v120 = vrot.slane %v72, 4
    %v121 = vadd.f32 %v72, %v120
    %v122 = vrot.slane %v121, 2
    %v123 = vadd.f32 %v121, %v122
    %v124 = vrot.slane %v123, 1
    %v125 = vadd.f32 %v123, %v124
    %v126 = vrot.slane %v73, 4
    %v127 = vadd.f32 %v73, %v126
    %v128 = vrot.slane %v127, 2
    %v129 = vadd.f32 %v127, %v128
    %v130 = vrot.slane %v129, 1
    %v131 = vadd.f32 %v129, %v130
    %v132 = vrot.slane %v74, 4
    %v133 = vadd.f32 %v74, %v132
    %v134 = vrot.slane %v133, 2
    %v135 = vadd.f32 %v133, %v134
    %v136 = vrot.slane %v135, 1
    %v137 = vadd.f32 %v135, %v136
    %v138 = vrot.slane %v75, 4
    %v139 = vadd.f32 %v75, %v138
    %v140 = vrot.slane %v139, 2
    %v141 = vadd.f32 %v139, %v140
    %v142 = vrot.slane %v141, 1
    %v143 = vadd.f32 %v141, %v142
    %v144 = vrot.slane %v76, 4
    %v145 = vadd.f32 %v76, %v144
    %v146 = vrot.slane %v145, 2
    %v147 = vadd.f32 %v145, %v146
    %v148 = vrot.slane %v147, 1
    %v149 = vadd.f32 %v147, %v148
    %v150 = vrot.slane %v77, 4
    %v151 = vadd.f32 %v77, %v150
    %v152 = vrot.slane %v151, 2
    %v153 = vadd.f32 %v151, %v152
    %v154 = vrot.slane %v153, 1
    %v155 = vadd.f32 %v153, %v154
    %v156 = vrot.slane %v78, 4
    %v157 = vadd.f32 %v78, %v156
    %v158 = vrot.slane %v157, 2
    %v159 = vadd.f32 %v157, %v158
    %v160 = vrot.slane %v159, 1
    %v161 = vadd.f32 %v159, %v160
    %v162 = vrot.slane %v79, 4
    %v163 = vadd.f32 %v79, %v162
    %v164 = vrot.slane %v163, 2
    %v165 = vadd.f32 %v163, %v164
    %v166 = vrot.slane %v165, 1
    %v167 = vadd.f32 %v165, %v166
    %v168 = vrot.slane %v80, 4
    %v169 = vadd.f32 %v80, %v168
    %v170 = vrot.slane %v169, 2
    %v171 = vadd.f32 %v169, %v170
    %v172 = vrot.slane %v171, 1
    %v173 = vadd.f32 %v171, %v172
    %v174 = vrot.slane %v81, 4
    %v175 = vadd.f32 %v81, %v174
    %v176 = vrot.slane %v175, 2
    %v177 = vadd.f32 %v175, %v176
    %v178 = vrot.slane %v177, 1
    %v179 = vadd.f32 %v177, %v178
    %v180 = vrot.slane %v82, 4
    %v181 = vadd.f32 %v82, %v180
    %v182 = vrot.slane %v181, 2
    %v183 = vadd.f32 %v181, %v182
    %v184 = vrot.slane %v183, 1
    %v185 = vadd.f32 %v183, %v184
    %v186 = vrot.slane %v83, 4
    %v187 = vadd.f32 %v83, %v186
    %v188 = vrot.slane %v187, 2
    %v189 = vadd.f32 %v187, %v188
    %v190 = vrot.slane %v189, 1
    %v191 = vadd.f32 %v189, %v190
    %v192 = vrot.slane %v84, 4
    %v193 = vadd.f32 %v84, %v192
    %v194 = vrot.slane %v193, 2
    %v195 = vadd.f32 %v193, %v194
    %v196 = vrot.slane %v195, 1
    %v197 = vadd.f32 %v195, %v196
    %v198 = vrot.slane %v85, 4
    %v199 = vadd.f32 %v85, %v198
    %v200 = vrot.slane %v199, 2
    %v201 = vadd.f32 %v199, %v200
    %v202 = vrot.slane %v201, 1
    %v203 = vadd.f32 %v201, %v202
    %v204 = vrot.slane %v86, 4
    %v205 = vadd.f32 %v86, %v204
    %v206 = vrot.slane %v205, 2
    %v207 = vadd.f32 %v205, %v206
    %v208 = vrot.slane %v207, 1
    %v209 = vadd.f32 %v207, %v208
    %v210 = vrot.slane %v87, 4
    %v211 = vadd.f32 %v87, %v210
    %v212 = vrot.slane %v211, 2
    %v213 = vadd.f32 %v211, %v212
    %v214 = vrot.slane %v213, 1
    %v215 = vadd.f32 %v213, %v214
    %v216 = vrot.slane %v88, 4
    %v217 = vadd.f32 %v88, %v216
    %v218 = vrot.slane %v217, 2
    %v219 = vadd.f32 %v217, %v218
    %v220 = vrot.slane %v219, 1
    %v221 = vadd.f32 %v219, %v220
    %v222 = vrot.slane %v89, 4
    %v223 = vadd.f32 %v89, %v222
    %v224 = vrot.slane %v223, 2
    %v225 = vadd.f32 %v223, %v224
    %v226 = vrot.slane %v225, 1
    %v227 = vadd.f32 %v225, %v226
    %v228 = vrot.slane %v90, 4
    %v229 = vadd.f32 %v90, %v228
    %v230 = vrot.slane %v229, 2
    %v231 = vadd.f32 %v229, %v230
    %v232 = vrot.slane %v231, 1
    %v233 = vadd.f32 %v231, %v232
    %v234 = vrot.slane %v91, 4
    %v235 = vadd.f32 %v91, %v234
    %v236 = vrot.slane %v235, 2
    %v237 = vadd.f32 %v235, %v236
    %v238 = vrot.slane %v237, 1
    %v239 = vadd.f32 %v237, %v238
    %v240 = vrot.slane %v92, 4
    %v241 = vadd.f32 %v92, %v240
    %v242 = vrot.slane %v241, 2
    %v243 = vadd.f32 %v241, %v242
    %v244 = vrot.slane %v243, 1
    %v245 = vadd.f32 %v243, %v244
    %v246 = vrot.slane %v93, 4
    %v247 = vadd.f32 %v93, %v246
    %v248 = vrot.slane %v247, 2
    %v249 = vadd.f32 %v247, %v248
    %v250 = vrot.slane %v249, 1
    %v251 = vadd.f32 %v249, %v250
    %v252 = vrot.slane %v94, 4
    %v253 = vadd.f32 %v94, %v252
    %v254 = vrot.slane %v253, 2
    %v255 = vadd.f32 %v253, %v254
    %v256 = vrot.slane %v255, 1
    %v257 = vadd.f32 %v255, %v256
    %v258 = vrot.slane %v95, 4
    %v259 = vadd.f32 %v95, %v258
    %v260 = vrot.slane %v259, 2
    %v261 = vadd.f32 %v259, %v260
    %v262 = vrot.slane %v261, 1
    %v263 = vadd.f32 %v261, %v262
    %v264 = vrot.slane %v96, 4
    %v265 = vadd.f32 %v96, %v264
    %v266 = vrot.slane %v265, 2
    %v267 = vadd.f32 %v265, %v266
    %v268 = vrot.slane %v267, 1
    %v269 = vadd.f32 %v267, %v268
    %v270 = vrot.slane %v97, 4
    %v271 = vadd.f32 %v97, %v270
    %v272 = vrot.slane %v271, 2
    %v273 = vadd.f32 %v271, %v272
    %v274 = vrot.slane %v273, 1
    %v275 = vadd.f32 %v273, %v274
    %v276 = vrot.slane %v98, 4
    %v277 = vadd.f32 %v98, %v276
    %v278 = vrot.slane %v277, 2
    %v279 = vadd.f32 %v277, %v278
    %v280 = vrot.slane %v279, 1
    %v281 = vadd.f32 %v279, %v280
    %v282 = vrot.slane %v99, 4
    %v283 = vadd.f32 %v99, %v282
    %v284 = vrot.slane %v283, 2
    %v285 = vadd.f32 %v283, %v284
    %v286 = vrot.slane %v285, 1
    %v287 = vadd.f32 %v285, %v286
    %v288 = vrot.slane %v100, 4
    %v289 = vadd.f32 %v100, %v288
    %v290 = vrot.slane %v289, 2
    %v291 = vadd.f32 %v289, %v290
    %v292 = vrot.slane %v291, 1
    %v293 = vadd.f32 %v291, %v292
    %v294 = vrot.slane %v101, 4
    %v295 = vadd.f32 %v101, %v294
    %v296 = vrot.slane %v295, 2
    %v297 = vadd.f32 %v295, %v296
    %v298 = vrot.slane %v297, 1
    %v299 = vadd.f32 %v297, %v298
    %v300 = vrot.slane %v102, 4
    %v301 = vadd.f32 %v102, %v300
    %v302 = vrot.slane %v301, 2
    %v303 = vadd.f32 %v301, %v302
    %v304 = vrot.slane %v303, 1
    %v305 = vadd.f32 %v303, %v304
    %v306 = vrot.slane %v103, 4
    %v307 = vadd.f32 %v103, %v306
    %v308 = vrot.slane %v307, 2
    %v309 = vadd.f32 %v307, %v308
    %v310 = vrot.slane %v309, 1
    %v311 = vadd.f32 %v309, %v310
    %v312 = vrot.slane %v104, 4
    %v313 = vadd.f32 %v104, %v312
    %v314 = vrot.slane %v313, 2
    %v315 = vadd.f32 %v313, %v314
    %v316 = vrot.slane %v315, 1
    %v317 = vadd.f32 %v315, %v316
    %v318 = vrot.slane %v105, 4
    %v319 = vadd.f32 %v105, %v318
    %v320 = vrot.slane %v319, 2
    %v321 = vadd.f32 %v319, %v320
    %v322 = vrot.slane %v321, 1
    %v323 = vadd.f32 %v321, %v322
    %v324 = vrot.slane %v106, 4
    %v325 = vadd.f32 %v106, %v324
    %v326 = vrot.slane %v325, 2
    %v327 = vadd.f32 %v325, %v326
    %v328 = vrot.slane %v327, 1
    %v329 = vadd.f32 %v327, %v328
    %v330 = vrot.slane %v107, 4
    %v331 = vadd.f32 %v107, %v330
    %v332 = vrot.slane %v331, 2
    %v333 = vadd.f32 %v331, %v332
    %v334 = vrot.slane %v333, 1
    %v335 = vadd.f32 %v333, %v334
    %v336 = vrot.slane %v108, 4
    %v337 = vadd.f32 %v108, %v336
    %v338 = vrot.slane %v337, 2
    %v339 = vadd.f32 %v337, %v338
    %v340 = vrot.slane %v339, 1
    %v341 = vadd.f32 %v339, %v340
    %v342 = vrot.slane %v109, 4
    %v343 = vadd.f32 %v109, %v342
    %v344 = vrot.slane %v343, 2
    %v345 = vadd.f32 %v343, %v344
    %v346 = vrot.slane %v345, 1
    %v347 = vadd.f32 %v345, %v346
    %v348 = vrot.slane %v110, 4
    %v349 = vadd.f32 %v110, %v348
    %v350 = vrot.slane %v349, 2
    %v351 = vadd.f32 %v349, %v350
    %v352 = vrot.slane %v351, 1
    %v353 = vadd.f32 %v351, %v352
    %v354 = vrot.slane %v111, 4
    %v355 = vadd.f32 %v111, %v354
    %v356 = vrot.slane %v355, 2
    %v357 = vadd.f32 %v355, %v356
    %v358 = vrot.slane %v357, 1
    %v359 = vadd.f32 %v357, %v358
    %v360 = vrot.slane %v112, 4
    %v361 = vadd.f32 %v112, %v360
    %v362 = vrot.slane %v361, 2
    %v363 = vadd.f32 %v361, %v362
    %v364 = vrot.slane %v363, 1
    %v365 = vadd.f32 %v363, %v364
    %v366 = vrot.slane %v113, 4
    %v367 = vadd.f32 %v113, %v366
    %v368 = vrot.slane %v367, 2
    %v369 = vadd.f32 %v367, %v368
    %v370 = vrot.slane %v369, 1
    %v371 = vadd.f32 %v369, %v370
    %v372 = vrot.slane %v114, 4
    %v373 = vadd.f32 %v114, %v372
    %v374 = vrot.slane %v373, 2
    %v375 = vadd.f32 %v373, %v374
    %v376 = vrot.slane %v375, 1
    %v377 = vadd.f32 %v375, %v376
    %v378 = vrot.slane %v115, 4
    %v379 = vadd.f32 %v115, %v378
    %v380 = vrot.slane %v379, 2
    %v381 = vadd.f32 %v379, %v380
    %v382 = vrot.slane %v381, 1
    %v383 = vadd.f32 %v381, %v382
    %v384 = vrot.slane %v116, 4
    %v385 = vadd.f32 %v116, %v384
    %v386 = vrot.slane %v385, 2
    %v387 = vadd.f32 %v385, %v386
    %v388 = vrot.slane %v387, 1
    %v389 = vadd.f32 %v387, %v388
    %v390 = vrot.slane %v117, 4
    %v391 = vadd.f32 %v117, %v390
    %v392 = vrot.slane %v391, 2
    %v393 = vadd.f32 %v391, %v392
    %v394 = vrot.slane %v393, 1
    %v395 = vadd.f32 %v393, %v394
    %v396 = vrot.slane %v118, 4
    %v397 = vadd.f32 %v118, %v396
    %v398 = vrot.slane %v397, 2
    %v399 = vadd.f32 %v397, %v398
    %v400 = vrot.slane %v399, 1
    %v401 = vadd.f32 %v399, %v400
    %v402 = vrot.slane %v119, 4
    %v403 = vadd.f32 %v119, %v402
    %v404 = vrot.slane %v403, 2
    %v405 = vadd.f32 %v403, %v404
    %v406 = vrot.slane %v405, 1
    %v407 = vadd.f32 %v405, %v406
    %v408 = vld [vmem:[#allocation7] sm:$0xff]
    %v409 = vld [vmem:[#allocation5] sm:$0xff]
    %v410 = vld [vmem:[#allocation5 + $0x8] sm:$0xff]
    %v411 = vld [vmem:[#allocation5 + $0x10] sm:$0xff]
    %v412 = vld [vmem:[#allocation5 + $0x18] sm:$0xff]
    %v413 = vld [vmem:[#allocation5 + $0x20] sm:$0xff]
    %v414 = vld [vmem:[#allocation5 + $0x28] sm:$0xff]
    %v415 = vld [vmem:[#allocation5 + $0x30] sm:$0xff]
    %v416 = vld [vmem:[#allocation5 + $0x38] sm:$0xff]
    %v417 = vld [vmem:[#allocation5 + $0x40] sm:$0xff]
    %v418 = vld [vmem:[#allocation5 + $0x48] sm:$0xff]
    %v419 = vld [vmem:[#allocation5 + $0x50] sm:$0xff]
    %v420 = vld [vmem:[#allocation5 + $0x58] sm:$0xff]
    %v421 = vld [vmem:[#allocation5 + $0x60] sm:$0xff]
    %v422 = vld [vmem:[#allocation5 + $0x68] sm:$0xff]
    %v423 = vld [vmem:[#allocation5 + $0x70] sm:$0xff]
    %v424 = vld [vmem:[#allocation5 + $0x78] sm:$0xff]
    %v425 = vld [vmem:[#allocation5 + $0x80] sm:$0xff]
    %v426 = vld [vmem:[#allocation5 + $0x88] sm:$0xff]
    %v427 = vld [vmem:[#allocation5 + $0x90] sm:$0xff]
    %v428 = vld [vmem:[#allocation5 + $0x98] sm:$0xff]
    %v429 = vld [vmem:[#allocation5 + $0xa0] sm:$0xff]
    %v430 = vld [vmem:[#allocation5 + $0xa8] sm:$0xff]
    %v431 = vld [vmem:[#allocation5 + $0xb0] sm:$0xff]
    %v432 = vld [vmem:[#allocation5 + $0xb8] sm:$0xff]
    %v433 = vld [vmem:[#allocation5 + $0xc0] sm:$0xff]
    %v434 = vld [vmem:[#allocation5 + $0xc8] sm:$0xff]
    %v435 = vld [vmem:[#allocation5 + $0xd0] sm:$0xff]
    %v436 = vld [vmem:[#allocation5 + $0xd8] sm:$0xff]
    %v437 = vld [vmem:[#allocation5 + $0xe0] sm:$0xff]
    %v438 = vld [vmem:[#allocation5 + $0xe8] sm:$0xff]
    %v439 = vld [vmem:[#allocation5 + $0xf0] sm:$0xff]
    %v440 = vld [vmem:[#allocation5 + $0xf8] sm:$0xff]
    %v441 = vld [vmem:[#allocation5 + $0x100] sm:$0xff]
    %v442 = vld [vmem:[#allocation5 + $0x108] sm:$0xff]
    %v443 = vld [vmem:[#allocation5 + $0x110] sm:$0xff]
    %v444 = vld [vmem:[#allocation5 + $0x118] sm:$0xff]
    %v445 = vld [vmem:[#allocation5 + $0x120] sm:$0xff]
    %v446 = vld [vmem:[#allocation5 + $0x128] sm:$0xff]
    %v447 = vld [vmem:[#allocation5 + $0x130] sm:$0xff]
    %v448 = vld [vmem:[#allocation5 + $0x138] sm:$0xff]
    %v449 = vld [vmem:[#allocation5 + $0x140] sm:$0xff]
    %v450 = vld [vmem:[#allocation5 + $0x148] sm:$0xff]
    %v451 = vld [vmem:[#allocation5 + $0x150] sm:$0xff]
    %v452 = vld [vmem:[#allocation5 + $0x158] sm:$0xff]
    %v453 = vld [vmem:[#allocation5 + $0x160] sm:$0xff]
    %v454 = vld [vmem:[#allocation5 + $0x168] sm:$0xff]
    %v455 = vld [vmem:[#allocation5 + $0x170] sm:$0xff]
    %v456 = vld [vmem:[#allocation5 + $0x178] sm:$0xff]
    %v457 = vld [vmem:[#allocation5 + $0x180] sm:$0xff]
    %v458 = vld [vmem:[#allocation5 + $0x188] sm:$0xff]
    %v459 = vld [vmem:[#allocation5 + $0x190] sm:$0xff]
    %v460 = vld [vmem:[#allocation5 + $0x198] sm:$0xff]
    %v461 = vld [vmem:[#allocation5 + $0x1a0] sm:$0xff]
    %v462 = vld [vmem:[#allocation5 + $0x1a8] sm:$0xff]
    %v463 = vld [vmem:[#allocation5 + $0x1b0] sm:$0xff]
    %v464 = vld [vmem:[#allocation5 + $0x1b8] sm:$0xff]
    %v465 = vld [vmem:[#allocation5 + $0x1c0] sm:$0xff]
    %v466 = vld [vmem:[#allocation5 + $0x1c8] sm:$0xff]
    %v467 = vld [vmem:[#allocation5 + $0x1d0] sm:$0xff]
    %v468 = vld [vmem:[#allocation5 + $0x1d8] sm:$0xff]
    %v469 = vld [vmem:[#allocation5 + $0x1e0] sm:$0xff]
    %v470 = vld [vmem:[#allocation5 + $0x1e8] sm:$0xff]
    %v471 = vld [vmem:[#allocation5 + $0x1f0] sm:$0xff]
    %v472 = vld [vmem:[#allocation5 + $0x1f8] sm:$0xff]
    %v473 = vld [vmem:[#allocation5 + $0x200] sm:$0xff]
    %v474 = vld [vmem:[#allocation5 + $0x208] sm:$0xff]
    %v475 = vld [vmem:[#allocation5 + $0x210] sm:$0xff]
    %v476 = vld [vmem:[#allocation5 + $0x218] sm:$0xff]
    %v477 = vld [vmem:[#allocation5 + $0x220] sm:$0xff]
    %v478 = vld [vmem:[#allocation5 + $0x228] sm:$0xff]
    %v479 = vld [vmem:[#allocation5 + $0x230] sm:$0xff]
    %v480 = vld [vmem:[#allocation5 + $0x238] sm:$0xff]
    %v481 = vld [vmem:[#allocation5 + $0x240] sm:$0xff]
    %v482 = vld [vmem:[#allocation5 + $0x248] sm:$0xff]
    %v483 = vld [vmem:[#allocation5 + $0x250] sm:$0xff]
    %v484 = vld [vmem:[#allocation5 + $0x258] sm:$0xff]
    %v485 = vld [vmem:[#allocation5 + $0x260] sm:$0xff]
    %v486 = vld [vmem:[#allocation5 + $0x268] sm:$0xff]
    %v487 = vld [vmem:[#allocation5 + $0x270] sm:$0xff]
    %v488 = vld [vmem:[#allocation5 + $0x278] sm:$0xff]
    %v489 = vld [vmem:[#allocation5 + $0x280] sm:$0xff]
    %v490 = vld [vmem:[#allocation5 + $0x288] sm:$0xff]
    %v491 = vld [vmem:[#allocation5 + $0x290] sm:$0xff]
    %v492 = vld [vmem:[#allocation5 + $0x298] sm:$0xff]
    %v493 = vld [vmem:[#allocation5 + $0x2a0] sm:$0xff]
    %v494 = vld [vmem:[#allocation5 + $0x2a8] sm:$0xff]
    %v495 = vld [vmem:[#allocation5 + $0x2b0] sm:$0xff]
    %v496 = vld [vmem:[#allocation5 + $0x2b8] sm:$0xff]
    %v497 = vld [vmem:[#allocation5 + $0x2c0] sm:$0xff]
    %v498 = vld [vmem:[#allocation5 + $0x2c8] sm:$0xff]
    %v499 = vld [vmem:[#allocation5 + $0x2d0] sm:$0xff]
    %v500 = vld [vmem:[#allocation5 + $0x2d8] sm:$0xff]
    %v501 = vld [vmem:[#allocation5 + $0x2e0] sm:$0xff]
    %v502 = vld [vmem:[#allocation5 + $0x2e8] sm:$0xff]
    %v503 = vld [vmem:[#allocation5 + $0x2f0] sm:$0xff]
    %v504 = vld [vmem:[#allocation5 + $0x2f8] sm:$0xff]
    %vm553 = vcmask 1041409
    %v554 = vsel %vm553, %v161, %v125
    %vm555 = vcmask 1042434
    %v556 = vsel %vm555, %v197, %v554
    %vm557 = vcmask 1043459
    %v558 = vsel %vm557, %v233, %v556
    %vm559 = vcmask 1044484
    %v560 = vsel %vm559, %v269, %v558
    %vm561 = vcmask 1045509
    %v562 = vsel %vm561, %v305, %v560
    %vm563 = vcmask 1046534
    %v564 = vsel %vm563, %v341, %v562
    %vm565 = vcmask 1047559
    %v566 = vsel %vm565, %v377, %v564
    %v567 = vsel %vm553, %v167, %v131
    %v568 = vsel %vm555, %v203, %v567
    %v569 = vsel %vm557, %v239, %v568
    %v570 = vsel %vm559, %v275, %v569
    %v571 = vsel %vm561, %v311, %v570
    %v572 = vsel %vm563, %v347, %v571
    %v573 = vsel %vm565, %v383, %v572
    %v574 = vsel %vm553, %v173, %v137
    %v575 = vsel %vm555, %v209, %v574
    %v576 = vsel %vm557, %v245, %v575
    %v577 = vsel %vm559, %v281, %v576
    %v578 = vsel %vm561, %v317, %v577
    %v579 = vsel %vm563, %v353, %v578
    %v580 = vsel %vm565, %v389, %v579
    %v581 = vsel %vm553, %v179, %v143
    %v582 = vsel %vm555, %v215, %v581
    %v583 = vsel %vm557, %v251, %v582
    %v584 = vsel %vm559, %v287, %v583
    %v585 = vsel %vm561, %v323, %v584
    %v586 = vsel %vm563, %v359, %v585
    %v587 = vsel %vm565, %v395, %v586
    %v588 = vsel %vm553, %v185, %v149
    %v589 = vsel %vm555, %v221, %v588
    %v590 = vsel %vm557, %v257, %v589
    %v591 = vsel %vm559, %v293, %v590
    %v592 = vsel %vm561, %v329, %v591
    %v593 = vsel %vm563, %v365, %v592
    %v594 = vsel %vm565, %v401, %v593
    %v595 = vsel %vm553, %v191, %v155
    %v596 = vsel %vm555, %v227, %v595
    %v597 = vsel %vm557, %v263, %v596
    %v598 = vsel %vm559, %v299, %v597
    %v599 = vsel %vm561, %v335, %v598
    %v600 = vsel %vm563, %v371, %v599
    %v601 = vsel %vm565, %v407, %v600
    %608 = vmatprep.subr.mxu0 0.0
    %609 = vmatpush1.msra.mxu0 %v409
    %610 = vmatprep.subr.mxu0 0.0
    %611 = vmatpush1.msra.mxu0 %v410
    %612 = vmatprep.subr.mxu0 0.0
    %613 = vmatpush1.msra.mxu0 %v411
    %614 = vmatprep.subr.mxu0 0.0
    %615 = vmatpush1.msra.mxu0 %v412
    %616 = vmatprep.subr.mxu0 0.0
    %617 = vmatpush1.msra.mxu0 %v413
    %618 = vmatprep.subr.mxu0 0.0
    %619 = vmatpush1.msra.mxu0 %v414
    %620 = vmatprep.subr.mxu0 0.0
    %621 = vmatpush1.msra.mxu0 %v415
    %622 = vmatprep.subr.mxu0 0.0
    %623 = vmatpush1.msra.mxu0 %v416
    %624 = vmatprep.subr.mxu0 0.0
    %625 = vmatpush1.msra.mxu0 %v417
    %626 = vmatprep.subr.mxu0 0.0
    %627 = vmatpush1.msra.mxu0 %v418
    %628 = vmatprep.subr.mxu0 0.0
    %629 = vmatpush1.msra.mxu0 %v419
    %630 = vmatprep.subr.mxu0 0.0
    %631 = vmatpush1.msra.mxu0 %v420
    %632 = vmatprep.subr.mxu0 0.0
    %633 = vmatpush1.msra.mxu0 %v421
    %634 = vmatprep.subr.mxu0 0.0
    %635 = vmatpush1.msra.mxu0 %v422
    %636 = vmatprep.subr.mxu0 0.0
    %637 = vmatpush1.msra.mxu0 %v423
    %638 = vmatprep.subr.mxu0 0.0
    %639 = vmatpush1.msra.mxu0 %v424
    %640 = vmatprep.subr.mxu0 0.0
    %641 = vmatpush1.msra.mxu0 %v425
    %642 = vmatprep.subr.mxu0 0.0
    %643 = vmatpush1.msra.mxu0 %v426
    %644 = vmatprep.subr.mxu0 0.0
    %645 = vmatpush1.msra.mxu0 %v427
    %646 = vmatprep.subr.mxu0 0.0
    %647 = vmatpush1.msra.mxu0 %v428
    %648 = vmatprep.subr.mxu0 0.0
    %649 = vmatpush1.msra.mxu0 %v429
    %650 = vmatprep.subr.mxu0 0.0
    %651 = vmatpush1.msra.mxu0 %v430
    %652 = vmatprep.subr.mxu0 0.0
    %653 = vmatpush1.msra.mxu0 %v431
    %654 = vmatprep.subr.mxu0 0.0
    %655 = vmatpush1.msra.mxu0 %v432
    %656 = vmatprep.subr.mxu0 0.0
    %657 = vmatpush1.msra.mxu0 %v433
    %658 = vmatprep.subr.mxu0 0.0
    %659 = vmatpush1.msra.mxu0 %v434
    %660 = vmatprep.subr.mxu0 0.0
    %661 = vmatpush1.msra.mxu0 %v435
    %662 = vmatprep.subr.mxu0 0.0
    %663 = vmatpush1.msra.mxu0 %v436
    %664 = vmatprep.subr.mxu0 0.0
    %665 = vmatpush1.msra.mxu0 %v437
    %666 = vmatprep.subr.mxu0 0.0
    %667 = vmatpush1.msra.mxu0 %v438
    %668 = vmatprep.subr.mxu0 0.0
    %669 = vmatpush1.msra.mxu0 %v439
    %670 = vmatprep.subr.mxu0 0.0
    %671 = vmatpush1.msra.mxu0 %v440
    %672 = vmatprep.mubr.f32.mxu0 %v573
    %673 = vmatmul.mubr.f32.gmra.mrb[0].mxu0 %v566
    %v674 = vpop.f32.mrb[0].mxu0
    %v675 = vadd.f32 0.0, %v674
    %v676 = vpop.f32.mrb[0].mxu0
    %677 = vdwg.mxu0
    %678 = vmatprep.subr.mxu0 0.0
    %679 = vmatpush1.msra.mxu0 %v441
    %680 = vmatprep.subr.mxu0 0.0
    %681 = vmatpush1.msra.mxu0 %v442
    %682 = vmatprep.subr.mxu0 0.0
    %683 = vmatpush1.msra.mxu0 %v443
    %684 = vmatprep.subr.mxu0 0.0
    %685 = vmatpush1.msra.mxu0 %v444
    %686 = vmatprep.subr.mxu0 0.0
    %687 = vmatpush1.msra.mxu0 %v445
    %688 = vmatprep.subr.mxu0 0.0
    %689 = vmatpush1.msra.mxu0 %v446
    %690 = vmatprep.subr.mxu0 0.0
    %691 = vmatpush1.msra.mxu0 %v447
    %692 = vmatprep.subr.mxu0 0.0
    %693 = vmatpush1.msra.mxu0 %v448
    %694 = vmatprep.subr.mxu0 0.0
    %695 = vmatpush1.msra.mxu0 %v449
    %696 = vmatprep.subr.mxu0 0.0
    %697 = vmatpush1.msra.mxu0 %v450
    %698 = vmatprep.subr.mxu0 0.0
    %699 = vmatpush1.msra.mxu0 %v451
    %700 = vmatprep.subr.mxu0 0.0
    %701 = vmatpush1.msra.mxu0 %v452
    %702 = vmatprep.subr.mxu0 0.0
    %703 = vmatpush1.msra.mxu0 %v453
    %704 = vmatprep.subr.mxu0 0.0
    %705 = vmatpush1.msra.mxu0 %v454
    %706 = vmatprep.subr.mxu0 0.0
    %707 = vmatpush1.msra.mxu0 %v455
    %708 = vmatprep.subr.mxu0 0.0
    %709 = vmatpush1.msra.mxu0 %v456
    %710 = vmatprep.subr.mxu0 0.0
    %711 = vmatpush1.msra.mxu0 %v457
    %712 = vmatprep.subr.mxu0 0.0
    %713 = vmatpush1.msra.mxu0 %v458
    %714 = vmatprep.subr.mxu0 0.0
    %715 = vmatpush1.msra.mxu0 %v459
    %716 = vmatprep.subr.mxu0 0.0
    %717 = vmatpush1.msra.mxu0 %v460
    %718 = vmatprep.subr.mxu0 0.0
    %719 = vmatpush1.msra.mxu0 %v461
    %720 = vmatprep.subr.mxu0 0.0
    %721 = vmatpush1.msra.mxu0 %v462
    %722 = vmatprep.subr.mxu0 0.0
    %723 = vmatpush1.msra.mxu0 %v463
    %724 = vmatprep.subr.mxu0 0.0
    %725 = vmatpush1.msra.mxu0 %v464
    %726 = vmatprep.subr.mxu0 0.0
    %727 = vmatpush1.msra.mxu0 %v465
    %728 = vmatprep.subr.mxu0 0.0
    %729 = vmatpush1.msra.mxu0 %v466
    %730 = vmatprep.subr.mxu0 0.0
    %731 = vmatpush1.msra.mxu0 %v467
    %732 = vmatprep.subr.mxu0 0.0
    %733 = vmatpush1.msra.mxu0 %v468
    %734 = vmatprep.subr.mxu0 0.0
    %735 = vmatpush1.msra.mxu0 %v469
    %736 = vmatprep.subr.mxu0 0.0
    %737 = vmatpush1.msra.mxu0 %v470
    %738 = vmatprep.subr.mxu0 0.0
    %739 = vmatpush1.msra.mxu0 %v471
    %740 = vmatprep.subr.mxu0 0.0
    %741 = vmatpush1.msra.mxu0 %v472
    %742 = vmatprep.mubr.f32.mxu0 %v587
    %743 = vmatmul.mubr.f32.gmra.mrb[0].mxu0 %v580
    %v744 = vpop.f32.mrb[0].mxu0
    %v745 = vadd.f32 %v675, %v744
    %v746 = vpop.f32.mrb[0].mxu0
    %747 = vdwg.mxu0
    %748 = vmatprep.subr.mxu0 0.0
    %749 = vmatpush1.msra.mxu0 %v473
    %750 = vmatprep.subr.mxu0 0.0
    %751 = vmatpush1.msra.mxu0 %v474
    %752 = vmatprep.subr.mxu0 0.0
    %753 = vmatpush1.msra.mxu0 %v475
    %754 = vmatprep.subr.mxu0 0.0
    %755 = vmatpush1.msra.mxu0 %v476
    %756 = vmatprep.subr.mxu0 0.0
    %757 = vmatpush1.msra.mxu0 %v477
    %758 = vmatprep.subr.mxu0 0.0
    %759 = vmatpush1.msra.mxu0 %v478
    %760 = vmatprep.subr.mxu0 0.0
    %761 = vmatpush1.msra.mxu0 %v479
    %762 = vmatprep.subr.mxu0 0.0
    %763 = vmatpush1.msra.mxu0 %v480
    %764 = vmatprep.subr.mxu0 0.0
    %765 = vmatpush1.msra.mxu0 %v481
    %766 = vmatprep.subr.mxu0 0.0
    %767 = vmatpush1.msra.mxu0 %v482
    %768 = vmatprep.subr.mxu0 0.0
    %769 = vmatpush1.msra.mxu0 %v483
    %770 = vmatprep.subr.mxu0 0.0
    %771 = vmatpush1.msra.mxu0 %v484
    %772 = vmatprep.subr.mxu0 0.0
    %773 = vmatpush1.msra.mxu0 %v485
    %774 = vmatprep.subr.mxu0 0.0
    %775 = vmatpush1.msra.mxu0 %v486
    %776 = vmatprep.subr.mxu0 0.0
    %777 = vmatpush1.msra.mxu0 %v487
    %778 = vmatprep.subr.mxu0 0.0
    %779 = vmatpush1.msra.mxu0 %v488
    %780 = vmatprep.subr.mxu0 0.0
    %781 = vmatpush1.msra.mxu0 %v489
    %782 = vmatprep.subr.mxu0 0.0
    %783 = vmatpush1.msra.mxu0 %v490
    %784 = vmatprep.subr.mxu0 0.0
    %785 = vmatpush1.msra.mxu0 %v491
    %786 = vmatprep.subr.mxu0 0.0
    %787 = vmatpush1.msra.mxu0 %v492
    %788 = vmatprep.subr.mxu0 0.0
    %789 = vmatpush1.msra.mxu0 %v493
    %790 = vmatprep.subr.mxu0 0.0
    %791 = vmatpush1.msra.mxu0 %v494
    %792 = vmatprep.subr.mxu0 0.0
    %793 = vmatpush1.msra.mxu0 %v495
    %794 = vmatprep.subr.mxu0 0.0
    %795 = vmatpush1.msra.mxu0 %v496
    %796 = vmatprep.subr.mxu0 0.0
    %797 = vmatpush1.msra.mxu0 %v497
    %798 = vmatprep.subr.mxu0 0.0
    %799 = vmatpush1.msra.mxu0 %v498
    %800 = vmatprep.subr.mxu0 0.0
    %801 = vmatpush1.msra.mxu0 %v499
    %802 = vmatprep.subr.mxu0 0.0
    %803 = vmatpush1.msra.mxu0 %v500
    %804 = vmatprep.subr.mxu0 0.0
    %805 = vmatpush1.msra.mxu0 %v501
    %806 = vmatprep.subr.mxu0 0.0
    %807 = vmatpush1.msra.mxu0 %v502
    %808 = vmatprep.subr.mxu0 0.0
    %809 = vmatpush1.msra.mxu0 %v503
    %810 = vmatprep.subr.mxu0 0.0
    %811 = vmatpush1.msra.mxu0 %v504
    %812 = vmatprep.mubr.f32.mxu0 %v601
    %813 = vmatmul.mubr.f32.gmra.mrb[0].mxu0 %v594
    %v814 = vpop.f32.mrb[0].mxu0
    %v815 = vadd.f32 %v745, %v814
    %v816 = vpop.f32.mrb[0].mxu0
    %817 = vdwg.mxu0
    %v818 = vadd.f32 %v408, %v815
    %819 = vst [vmem:[#allocation7] sm:$0xff] %v818
    // Predicated region
    $region26: #{multitask_forward.1} parent=1 // pred_check
      %p820 = pneg %p43
    $region27: #{multitask_forward.1} parent=1 // pred_check_branch
      %822 = sbr.rel (%p820) target = $region29
    $region28: #{multitask_forward.1} parent=1 // pred_region
      %v823 = vld [vmem:[#allocation7] sm:$0xff]
      %v824 = vmul.f32 %v823, 0.125
      %v825 = vld [vmem:[%s2] sm:$0x1]
      %v827 = vlaneseq
      %v828 = vshrl.u32 %v827, 7
      %v829 = vsub.s32 0, %v828
      %v830 = vrot.slane %v825, %v829
      %v832 = vadd.f32 %v824, %v830
      %v833 = vxor.u32 %v832, 2147483648
      %v834 = vmul.f32 %v833, 1.442695
      %v835 = vpow.pop %v834
      %v836 = vadd.f32 %v835, 1.0
      %v837 = vrcp.pop %v836
      %v838 = vmul.f32 1.0, %v837
      %839 = vst [vmem:[#allocation7] sm:$0xff] %v838
    $region29: #{multitask_forward.1} parent=1 // pred_fallthru
      _
    // Predicated region
    $region30: #{multitask_forward.1} parent=1 // pred_check
      _
    $region31: #{multitask_forward.1} parent=1 // pred_check_branch
      %841 = sbr.rel (0) target = $region33
    $region32: #{multitask_forward.1} parent=1 // pred_region
      %s843 = ssub.s32 128, 32
      %844 = vsyncadd [#allocation4], %s843
      %s845 = sshll.u32 [#allocation7], 4
      %s846 = int_to_ptr.vmem [resolvable:$true] %s845
      %851 = dma.vmem_to_hbm [thread:$0]  %s846, 32, %s3, [#allocation4], 32, 32, 2
    $region33: #{multitask_forward.1} parent=1 // pred_fallthru
      _
    // Predicated region
    $region34: #{multitask_forward.1} parent=1 // pred_check
      _
    $region35: #{multitask_forward.1} parent=1 // pred_check_branch
      %853 = sbr.rel (0) target = $region37
    $region36: #{multitask_forward.1} parent=1 // pred_region
      %854 = dma.done [#allocation4], 128
    $region37: #{multitask_forward.1} parent=1 // pred_fallthru
      _
    %855 = vsyncpa [#allocation3], 1
    %856 = vsyncpa [#allocation6], 1
    %857 = vsyncpa [#allocation4], 1

</llo_original>
